<compile_context>
chip_gen: v6e
topology: v6e:2x2x1
jax: 0.10.0
libtpu: 0.0.40
codegen_flags: <defaults>
</compile_context>

<pallas_src>
import jax
import jax.numpy as jnp
from jax.experimental import pallas as pl
from jax.experimental.pallas import tpu as pltpu  # noqa: F401  (kept for TPU-specific tuning hooks)


def gcn_kernel(x_ref, a_ref, w_ref, b_ref, o_ref):
    # x_ref : (B*K, D*T)   x with (d, t) on the lane axis; rows are (b, k)
    # a_ref : (B*N, B*K)   kron(I_B, adj / deg)  -- batch-block-diagonal normalized adjacency
    # w_ref : (D*T, D*O)   kron(I_D, fc1.weight.T @ mlp.weight.T)  (folded fc1 -> mlp)
    # b_ref : (1, D*O)     mlp.bias tiled across d
    # o_ref : (B*N, D*O)   rows are (b, n), cols are (d, o); lane-dense (128-wide) store
    xw = jnp.dot(x_ref[...], w_ref[...],
                 preferred_element_type=jnp.float32)        # X @ W12_kron   -> (B*K, D*O)
    g = jnp.dot(a_ref[...], xw,
                preferred_element_type=jnp.float32)         # A_big @ XW     -> (B*N, D*O)
    o_ref[...] = (g + b_ref[...]).astype(o_ref.dtype)


def gcn_forward(x, adj, w1, w2, b2):
    B, D, K, T = x.shape
    N = adj.shape[0]
    O = w2.shape[1]

    # Invariant preprocessing, hoisted out of the kernel (tiny XLA ops, once per call).
    a = adj / jnp.sum(adj, axis=1, keepdims=True)          # (N, K) normalized adjacency
    a_big = jnp.kron(jnp.eye(B, dtype=a.dtype), a)         # (B*N, B*K) batch-block-diagonal
    w12 = w1 @ w2                                          # (T, O) folded fc1 -> mlp weight
    w_kron = jnp.kron(jnp.eye(D, dtype=w12.dtype), w12)    # (D*T, D*O), D on the lane axis
    b_tiled = jnp.tile(b2.reshape(1, O), (1, D))           # (1, D*O)
    x2 = x.transpose(0, 2, 1, 3).reshape(B * K, D * T)     # rows=(b,k), cols=(d,t)

    flops = 2 * (B * K) * (D * T) * (D * O) + 2 * (B * N) * (B * K) * (D * O)
    bytes_accessed = 4 * (B * K * D * T + (B * N) * (B * K)
                          + (D * T) * (D * O) + D * O + (B * N) * (D * O))

    out = pl.pallas_call(
        gcn_kernel,
        out_shape=jax.ShapeDtypeStruct((B * N, D * O), x.dtype),
        cost_estimate=pl.CostEstimate(flops=flops,
                                      transcendentals=0,
                                      bytes_accessed=bytes_accessed),
    )(x2, a_big, w_kron, b_tiled)

    # rows=(b,n), cols=(d,o)  ->  (B, D, N, O)
    return out.reshape(B, N, D, O).transpose(0, 2, 1, 3)


if __name__ == "__main__":
    key = jax.random.PRNGKey(0)
    # B, D, K(=N nodes), T(=in_dim), O(=out_dim)
    B, D, K, T, O = 2, 4, 8, 16, 32
    N = K
    kx, ka, k1, k2, kb = jax.random.split(key, 5)

    x = jax.random.normal(kx, (B, D, K, T), dtype=jnp.float32)
    # strictly positive adjacency so row sums are nonzero (matches PyTorch precondition)
    adj = jax.random.uniform(ka, (N, K), dtype=jnp.float32, minval=0.1, maxval=1.0)

    # deterministic nn.Linear-style init (uniform with fan-in bound), pre-transposed
    bound1 = 1.0 / (T ** 0.5)
    bound2 = 1.0 / (O ** 0.5)
    w1 = jax.random.uniform(k1, (T, O), dtype=jnp.float32, minval=-bound1, maxval=bound1)  # fc1.weight.T
    w2 = jax.random.uniform(k2, (O, O), dtype=jnp.float32, minval=-bound2, maxval=bound2)  # mlp.weight.T
    b2 = jax.random.uniform(kb, (O,), dtype=jnp.float32, minval=-bound2, maxval=bound2)    # mlp.bias

    out = jax.block_until_ready(gcn_forward(x, adj, w1, w2, b2))

    # plain-JAX reference for correctness
    a_ref = adj / adj.sum(1, keepdims=True)
    ref = jnp.einsum('bdkt,nk->bdnt', x, a_ref) @ w1 @ w2 + b2
    assert out.shape == (B, D, N, O)
    assert jnp.allclose(out, ref, atol=1e-4, rtol=1e-4)
    print("KERNEL_OK")
</pallas_src>

<mosaic_0001>
module attributes {stable_mosaic.version = 11 : i64} {
  func.func @gcn_kernel(%arg0: memref<16x64xf32, #tpu.memory_space<vmem>>, %arg1: memref<16x16xf32, #tpu.memory_space<vmem>>, %arg2: memref<64x128xf32, #tpu.memory_space<vmem>>, %arg3: memref<1x128xf32, #tpu.memory_space<vmem>>, %arg4: memref<16x128xf32, #tpu.memory_space<vmem>>) attributes {dimension_semantics = [], scalar_prefetch = 0 : i64, scratch_operands = 0 : i64, tpu.core_type = #tpu.core_type<tc>} {
    %c0 = arith.constant 0 : index
    %c0_0 = arith.constant 0 : index
    %0 = vector.load %arg0[%c0, %c0_0] : memref<16x64xf32, #tpu.memory_space<vmem>>, vector<16x64xf32>
    %c0_1 = arith.constant 0 : index
    %c0_2 = arith.constant 0 : index
    %1 = vector.load %arg2[%c0_1, %c0_2] : memref<64x128xf32, #tpu.memory_space<vmem>>, vector<64x128xf32>
    %cst = arith.constant dense<0.000000e+00> : vector<16x128xf32>
    %2 = tpu.matmul %0, %1, %cst {dimension_numbers = #tpu.dot_dimension_numbers<[1], [0], [0], [1], [0, 0, 1, 1], [], []>} : vector<16x64xf32>, vector<64x128xf32>, vector<16x128xf32> -> vector<16x128xf32>
    %c0_3 = arith.constant 0 : index
    %c0_4 = arith.constant 0 : index
    %3 = vector.load %arg1[%c0_3, %c0_4] : memref<16x16xf32, #tpu.memory_space<vmem>>, vector<16x16xf32>
    %cst_5 = arith.constant dense<0.000000e+00> : vector<16x128xf32>
    %4 = tpu.matmul %3, %2, %cst_5 {dimension_numbers = #tpu.dot_dimension_numbers<[1], [0], [0], [1], [0, 0, 1, 1], [], []>} : vector<16x16xf32>, vector<16x128xf32>, vector<16x128xf32> -> vector<16x128xf32>
    %c0_6 = arith.constant 0 : index
    %c0_7 = arith.constant 0 : index
    %5 = vector.load %arg3[%c0_6, %c0_7] : memref<1x128xf32, #tpu.memory_space<vmem>>, vector<1x128xf32>
    %6 = vector.broadcast %5 : vector<1x128xf32> to vector<16x128xf32>
    %7 = arith.addf %4, %6 : vector<16x128xf32>
    %c0_8 = arith.constant 0 : index
    %c0_9 = arith.constant 0 : index
    %8 = vector.load %arg4[%c0_8, %c0_9] : memref<16x128xf32, #tpu.memory_space<vmem>>, vector<16x128xf32>
    tpu.vector_store %arg4[%c0_8, %c0_9], %7 {strides = array<i32>} : memref<16x128xf32, #tpu.memory_space<vmem>>, vector<16x128xf32>,
    return
  }
}

</mosaic_0001>

<llo_original>
// kernel: tpu_custom_call.1
$region0: #{tpu_custom_call.1}
  #allocation0 [shape = 'u32[]', space=smem, size = 0x4, offset = 0x4, fixed_abs, tag = 'smem constant byte address 0x4 - core index']
  #allocation1 [shape = 'u32[144,128]{1,0:T(1,128)}', space=vmem, size = 0x12000, scoped, tag = 'internal scratch']
  %s0 = inlined_call_operand.hbm [shape: f32[16,64], index: 0, kind: input, shape index: {}]
  %s1 = inlined_call_operand.hbm [shape: f32[16,16], index: 1, kind: input, shape index: {}]
  %s2 = inlined_call_operand.hbm [shape: f32[64,128], index: 2, kind: input, shape index: {}]
  %s3 = inlined_call_operand.vmem [shape: f32[1,128], index: 3, kind: input, shape index: {}]
  %s4 = inlined_call_operand.hbm [shape: f32[16,128], index: 4, kind: output, shape index: {}]
  %s5 = sld [smem:[#allocation0]]
  $region38: #{tpu_custom_call.1} parent=0
    _
  %s7 = ssub.s32 1, %s5
  %s8 = scalar_select 0, %s7, %s5
  $region1: #{tpu_custom_call.1} parent=0
    #allocation2 [shape = 'u8[8192]{0}', space=vmem, size = 0x2000, scoped, tag = 'input window, operand 0, single buffered']
    #allocation3 [shape = 's32[1]{0}', space=sflag, size = 0x4, scoped, tag = 'scoped memory for tpu_custom_call.1']
    #allocation4 [shape = 's32[1]{0}', space=sflag, size = 0x4, scoped, tag = 'scoped memory for tpu_custom_call.1']
    #allocation5 [shape = 'u8[8192]{0}', space=vmem, size = 0x2000, scoped, tag = 'input window, operand 1, single buffered']
    #allocation6 [shape = 's32[1]{0}', space=sflag, size = 0x4, scoped, tag = 'scoped memory for tpu_custom_call.1']
    #allocation7 [shape = 'u8[32768]{0}', space=vmem, size = 0x8000, scoped, tag = 'input window, operand 2, single buffered']
    #allocation8 [shape = 'u8[8192]{0}', space=vmem, size = 0x2000, scoped, tag = 'output window, operand 0, single buffered']
    %9 = vsyncpa [#allocation3], 0
    %10 = vsyncpa [#allocation6], 0
    %11 = vsyncpa [#allocation4], 0
    // Predicated region
    $region2: #{tpu_custom_call.1} parent=1 // pred_check
      _
    $region3: #{tpu_custom_call.1} parent=1 // pred_check_branch
      %13 = sbr.rel (0) target = $region5
    $region4: #{tpu_custom_call.1} parent=1 // pred_region
      %s15 = ssub.s32 256, 256
      %16 = vsyncadd [#allocation3], %s15
      %s17 = sshll.u32 [#allocation2], 4
      %s18 = int_to_ptr.vmem [resolvable:$true] %s17
      %23 = dma.hbm_to_vmem [thread:$0]  %s0, 256, %s18, [#allocation3], 128, 128, 8
    $region5: #{tpu_custom_call.1} parent=1 // pred_fallthru
      _
    // Predicated region
    $region6: #{tpu_custom_call.1} parent=1 // pred_check
      _
    $region7: #{tpu_custom_call.1} parent=1 // pred_check_branch
      %25 = sbr.rel (0) target = $region9
    $region8: #{tpu_custom_call.1} parent=1 // pred_region
      %s27 = ssub.s32 256, 256
      %28 = vsyncadd [#allocation6], %s27
      %s29 = sshll.u32 [#allocation5], 4
      %s30 = int_to_ptr.vmem [resolvable:$true] %s29
      %35 = dma.hbm_to_vmem [thread:$0]  %s1, 256, %s30, [#allocation6], 128, 128, 8
    $region9: #{tpu_custom_call.1} parent=1 // pred_fallthru
      _
    // Predicated region
    $region10: #{tpu_custom_call.1} parent=1 // pred_check
      _
    $region11: #{tpu_custom_call.1} parent=1 // pred_check_branch
      %37 = sbr.rel (0) target = $region13
    $region12: #{tpu_custom_call.1} parent=1 // pred_region
      %s39 = ssub.s32 1024, 1024
      %40 = vsyncadd [#allocation6], %s39
      %s41 = sshll.u32 [#allocation7], 4
      %s42 = int_to_ptr.vmem [resolvable:$true] %s41
      %47 = dma.hbm_to_vmem [thread:$0]  %s2, 1024, %s42, [#allocation6], 128, 128, 8
    $region13: #{tpu_custom_call.1} parent=1 // pred_fallthru
      _
    // Predicated region
    $region14: #{tpu_custom_call.1} parent=1 // pred_check
      _
    $region15: #{tpu_custom_call.1} parent=1 // pred_check_branch
      %49 = sbr.rel (0) target = $region17
    $region16: #{tpu_custom_call.1} parent=1 // pred_region
      _
    $region17: #{tpu_custom_call.1} parent=1 // pred_fallthru
      _
    // Predicated region
    $region18: #{tpu_custom_call.1} parent=1 // pred_check
      _
    $region19: #{tpu_custom_call.1} parent=1 // pred_check_branch
      %51 = sbr.rel (0) target = $region21
    $region20: #{tpu_custom_call.1} parent=1 // pred_region
      %52 = dma.done [#allocation3], 256
    $region21: #{tpu_custom_call.1} parent=1 // pred_fallthru
      _
    // Predicated region
    $region22: #{tpu_custom_call.1} parent=1 // pred_check
      _
    $region23: #{tpu_custom_call.1} parent=1 // pred_check_branch
      %54 = sbr.rel (0) target = $region25
    $region24: #{tpu_custom_call.1} parent=1 // pred_region
      %55 = dma.done [#allocation6], 256
    $region25: #{tpu_custom_call.1} parent=1 // pred_fallthru
      _
    // Predicated region
    $region26: #{tpu_custom_call.1} parent=1 // pred_check
      _
    $region27: #{tpu_custom_call.1} parent=1 // pred_check_branch
      %57 = sbr.rel (0) target = $region29
    $region28: #{tpu_custom_call.1} parent=1 // pred_region
      %58 = dma.done [#allocation6], 1024
    $region29: #{tpu_custom_call.1} parent=1 // pred_fallthru
      _
    %v59 = vld [vmem:[#allocation2] sm:$0xff]
    %v60 = vld [vmem:[#allocation2 + $0x8] sm:$0xff]
    %v61 = vld [vmem:[#allocation7] sm:$0xff]
    %v62 = vld [vmem:[#allocation7 + $0x8] sm:$0xff]
    %v63 = vld [vmem:[#allocation7 + $0x10] sm:$0xff]
    %v64 = vld [vmem:[#allocation7 + $0x18] sm:$0xff]
    %v65 = vld [vmem:[#allocation7 + $0x20] sm:$0xff]
    %v66 = vld [vmem:[#allocation7 + $0x28] sm:$0xff]
    %v67 = vld [vmem:[#allocation7 + $0x30] sm:$0xff]
    %v68 = vld [vmem:[#allocation7 + $0x38] sm:$0xff]
    %vm69 = vcmask 523264
    %v71 = vsel %vm69, %v59, 0
    %v74 = vsel %vm69, %v60, 0
    %76 = vmatprep.subr.mxu0 0.0
    %77 = vmatpush1.msra.mxu0 0.0
    %78 = vmatprep.subr.mxu0 0.0
    %79 = vmatpush1.msra.mxu0 0.0
    %80 = vmatprep.subr.mxu0 0.0
    %81 = vmatpush1.msra.mxu0 0.0
    %82 = vmatprep.subr.mxu0 0.0
    %83 = vmatpush1.msra.mxu0 0.0
    %84 = vmatprep.subr.mxu0 0.0
    %85 = vmatpush1.msra.mxu0 0.0
    %86 = vmatprep.subr.mxu0 0.0
    %87 = vmatpush1.msra.mxu0 0.0
    %88 = vmatprep.subr.mxu0 0.0
    %89 = vmatpush1.msra.mxu0 0.0
    %90 = vmatprep.subr.mxu0 0.0
    %91 = vmatpush1.msra.mxu0 0.0
    %92 = vmatprep.subr.mxu0 0.0
    %93 = vmatpush1.msra.mxu0 %v68
    %94 = vmatprep.subr.mxu0 0.0
    %95 = vmatpush1.msra.mxu0 %v67
    %96 = vmatprep.subr.mxu0 0.0
    %97 = vmatpush1.msra.mxu0 %v66
    %98 = vmatprep.subr.mxu0 0.0
    %99 = vmatpush1.msra.mxu0 %v65
    %100 = vmatprep.subr.mxu0 0.0
    %101 = vmatpush1.msra.mxu0 %v64
    %102 = vmatprep.subr.mxu0 0.0
    %103 = vmatpush1.msra.mxu0 %v63
    %104 = vmatprep.subr.mxu0 0.0
    %105 = vmatpush1.msra.mxu0 %v62
    %106 = vmatprep.subr.mxu0 0.0
    %107 = vmatpush1.msra.mxu0 %v61
    %108 = vmatprep.subr.mxu0 0.0
    %109 = vmatpush2.msra.mxu0 0.0
    %110 = vmatprep.subr.mxu0 0.0
    %111 = vmatpush2.msra.mxu0 0.0
    %112 = vmatprep.subr.mxu0 0.0
    %113 = vmatpush2.msra.mxu0 0.0
    %114 = vmatprep.subr.mxu0 0.0
    %115 = vmatpush2.msra.mxu0 0.0
    %116 = vmatprep.subr.mxu0 0.0
    %117 = vmatpush2.msra.mxu0 0.0
    %118 = vmatprep.subr.mxu0 0.0
    %119 = vmatpush2.msra.mxu0 0.0
    %120 = vmatprep.subr.mxu0 0.0
    %121 = vmatpush2.msra.mxu0 0.0
    %122 = vmatprep.subr.mxu0 0.0
    %123 = vmatpush2.msra.mxu0 0.0
    %124 = vmatprep.subr.mxu0 0.0
    %125 = vmatpush2.msra.mxu0 0.0
    %126 = vmatprep.subr.mxu0 0.0
    %127 = vmatpush2.msra.mxu0 0.0
    %128 = vmatprep.subr.mxu0 0.0
    %129 = vmatpush2.msra.mxu0 0.0
    %130 = vmatprep.subr.mxu0 0.0
    %131 = vmatpush2.msra.mxu0 0.0
    %132 = vmatprep.subr.mxu0 0.0
    %133 = vmatpush2.msra.mxu0 0.0
    %134 = vmatprep.subr.mxu0 0.0
    %135 = vmatpush2.msra.mxu0 0.0
    %136 = vmatprep.subr.mxu0 0.0
    %137 = vmatpush2.msra.mxu0 0.0
    %138 = vmatprep.subr.mxu0 0.0
    %139 = vmatpush2.msra.mxu0 0.0
    %140 = vmatprep.mubr.f32.mxu0 0.0
    %141 = vmatmul.mubr.f32.gmra.mxu0 %v71
    %v142 = vpop.f32.mrf.mxu0
    %v143 = vadd.f32 0.0, %v142
    %v144 = vpop.f32.mrf.mxu0
    %145 = vmatprep.mubr.f32.mxu0 0.0
    %146 = vmatmul.mubr.f32.gmra.mxu0 %v74
    %v147 = vpop.f32.mrf.mxu0
    %v148 = vadd.f32 0.0, %v147
    %v149 = vpop.f32.mrf.mxu0
    %150 = vdwg.mxu0
    %v151 = vld [vmem:[#allocation5] sm:$0xff]
    %v152 = vld [vmem:[#allocation5 + $0x8] sm:$0xff]
    %v153 = vld [vmem:[%s3] sm:$0x1]
    %v155 = vlaneseq
    %v156 = vshrl.u32 %v155, 7
    %v157 = vsub.s32 0, %v156
    %v158 = vrot.slane %v153, %v157
    %vm160 = vcmask 130048
    %v162 = vsel %vm160, %v151, 0
    %v165 = vsel %vm160, %v152, 0
    %167 = vmatprep.subr.mxu0 0.0
    %168 = vmatpush1.msra.mxu0 0.0
    %169 = vmatprep.subr.mxu0 0.0
    %170 = vmatpush1.msra.mxu0 0.0
    %171 = vmatprep.subr.mxu0 0.0
    %172 = vmatpush1.msra.mxu0 0.0
    %173 = vmatprep.subr.mxu0 0.0
    %174 = vmatpush1.msra.mxu0 0.0
    %175 = vmatprep.subr.mxu0 0.0
    %176 = vmatpush1.msra.mxu0 0.0
    %177 = vmatprep.subr.mxu0 0.0
    %178 = vmatpush1.msra.mxu0 0.0
    %179 = vmatprep.subr.mxu0 0.0
    %180 = vmatpush1.msra.mxu0 0.0
    %181 = vmatprep.subr.mxu0 0.0
    %182 = vmatpush1.msra.mxu0 0.0
    %183 = vmatprep.subr.mxu0 0.0
    %184 = vmatpush1.msra.mxu0 0.0
    %185 = vmatprep.subr.mxu0 0.0
    %186 = vmatpush1.msra.mxu0 0.0
    %187 = vmatprep.subr.mxu0 0.0
    %188 = vmatpush1.msra.mxu0 0.0
    %189 = vmatprep.subr.mxu0 0.0
    %190 = vmatpush1.msra.mxu0 0.0
    %191 = vmatprep.subr.mxu0 0.0
    %192 = vmatpush1.msra.mxu0 0.0
    %193 = vmatprep.subr.mxu0 0.0
    %194 = vmatpush1.msra.mxu0 0.0
    %195 = vmatprep.subr.mxu0 0.0
    %196 = vmatpush1.msra.mxu0 %v148
    %197 = vmatprep.subr.mxu0 0.0
    %198 = vmatpush1.msra.mxu0 %v143
    %199 = vmatprep.subr.mxu0 0.0
    %200 = vmatpush2.msra.mxu0 0.0
    %201 = vmatprep.subr.mxu0 0.0
    %202 = vmatpush2.msra.mxu0 0.0
    %203 = vmatprep.subr.mxu0 0.0
    %204 = vmatpush2.msra.mxu0 0.0
    %205 = vmatprep.subr.mxu0 0.0
    %206 = vmatpush2.msra.mxu0 0.0
    %207 = vmatprep.subr.mxu0 0.0
    %208 = vmatpush2.msra.mxu0 0.0
    %209 = vmatprep.subr.mxu0 0.0
    %210 = vmatpush2.msra.mxu0 0.0
    %211 = vmatprep.subr.mxu0 0.0
    %212 = vmatpush2.msra.mxu0 0.0
    %213 = vmatprep.subr.mxu0 0.0
    %214 = vmatpush2.msra.mxu0 0.0
    %215 = vmatprep.subr.mxu0 0.0
    %216 = vmatpush2.msra.mxu0 0.0
    %217 = vmatprep.subr.mxu0 0.0
    %218 = vmatpush2.msra.mxu0 0.0
    %219 = vmatprep.subr.mxu0 0.0
    %220 = vmatpush2.msra.mxu0 0.0
    %221 = vmatprep.subr.mxu0 0.0
    %222 = vmatpush2.msra.mxu0 0.0
    %223 = vmatprep.subr.mxu0 0.0
    %224 = vmatpush2.msra.mxu0 0.0
    %225 = vmatprep.subr.mxu0 0.0
    %226 = vmatpush2.msra.mxu0 0.0
    %227 = vmatprep.subr.mxu0 0.0
    %228 = vmatpush2.msra.mxu0 0.0
    %229 = vmatprep.subr.mxu0 0.0
    %230 = vmatpush2.msra.mxu0 0.0
    %231 = vmatprep.mubr.f32.mxu0 0.0
    %232 = vmatmul.mubr.f32.gmra.mxu0 %v162
    %v233 = vpop.f32.mrf.mxu0
    %v234 = vadd.f32 %v158, %v233
    %v235 = vpop.f32.mrf.mxu0
    %236 = vmatprep.mubr.f32.mxu0 0.0
    %237 = vmatmul.mubr.f32.gmra.mxu0 %v165
    %v238 = vpop.f32.mrf.mxu0
    %v239 = vadd.f32 %v158, %v238
    %v240 = vpop.f32.mrf.mxu0
    %241 = vdwg.mxu0
    %242 = vst [vmem:[#allocation8] sm:$0xff] %v234
    %243 = vst [vmem:[#allocation8 + $0x8] sm:$0xff] %v239
    // Predicated region
    $region30: #{tpu_custom_call.1} parent=1 // pred_check
      _
    $region31: #{tpu_custom_call.1} parent=1 // pred_check_branch
      %245 = sbr.rel (0) target = $region33
    $region32: #{tpu_custom_call.1} parent=1 // pred_region
      %s247 = ssub.s32 256, 256
      %248 = vsyncadd [#allocation4], %s247
      %s249 = sshll.u32 [#allocation8], 4
      %s250 = int_to_ptr.vmem [resolvable:$true] %s249
      %255 = dma.vmem_to_hbm [thread:$0]  %s250, 256, %s4, [#allocation4], 128, 128, 8
    $region33: #{tpu_custom_call.1} parent=1 // pred_fallthru
      _
    // Predicated region
    $region34: #{tpu_custom_call.1} parent=1 // pred_check
      _
    $region35: #{tpu_custom_call.1} parent=1 // pred_check_branch
      %257 = sbr.rel (0) target = $region37
    $region36: #{tpu_custom_call.1} parent=1 // pred_region
      %258 = dma.done [#allocation4], 256
    $region37: #{tpu_custom_call.1} parent=1 // pred_fallthru
      _
    %259 = vsyncpa [#allocation3], 1
    %260 = vsyncpa [#allocation6], 1
    %261 = vsyncpa [#allocation4], 1

</llo_original>
